<compile_context>
chip_gen: v5e
topology: v5e:2x2
jax: 0.10.0
libtpu: 0.0.40
codegen_flags: <defaults>
</compile_context>

<pallas_src>
import jax
import jax.numpy as jnp
from jax.experimental import pallas as pl
from jax.experimental.pallas import tpu as pltpu

N_P2 = 56       # p_fc2 output width
OUT_PAD = 128   # lane-dense output slab width (col 0 = c2, cols 1..56 = p2)


def _round_up(n, m):
    return ((n + m - 1) // m) * m


def _critic_kernel(x_ref, w1_ref, b1_ref, w2_ref, b2_ref, out_ref):
    x = x_ref[...]                                             # (TB, H)

    # Fused first layer: one full-width MXU matmul; h == [c1 | p1 | 0-pad].
    h = jnp.dot(x.astype(w1_ref.dtype), w1_ref[...],
                preferred_element_type=jnp.float32)            # (TB, HP)
    h = jnp.maximum(h + b1_ref[...], 0.0)

    # Fused second layer: both heads in one MXU matmul into the lane-dense
    # 128-wide slab (col 0 = c2 via wc2 in W2[:,0], cols 1..56 = p2).
    out = jnp.dot(h.astype(w2_ref.dtype), w2_ref[...],
                  preferred_element_type=jnp.float32)          # (TB, 128)
    out_ref[...] = out + b2_ref[...]


def pack_params(p, matmul_dtype=None):
    """Host-side packing.

    W1 (H, HP):  cols [0,H2) = wc1, [H2,H) = wp1, [H,HP) = 0   (HP = ceil256(H))
    W2 (HP,128): col 0 rows [0,H) = wc2; cols 1..56 rows [H2,H) = wp2; else 0
    b1 (1, HP), b2 (1, 128) hold the matching biases (bc2 in col 0).
    matmul_dtype=None -> auto: bf16 (f32 accumulation) for H >= 1024, else f32.
    """
    H = p["wc1"].shape[0]
    H2 = H // 2
    if matmul_dtype is None:
        matmul_dtype = jnp.bfloat16 if H >= 1024 else jnp.float32
    HP = _round_up(H, 256)

    w1 = (jnp.zeros((H, HP), jnp.float32)
          .at[:, :H2].set(p["wc1"])
          .at[:, H2:H].set(p["wp1"])
          .astype(matmul_dtype))                                      # (H, HP)
    b1 = (jnp.zeros((1, HP), jnp.float32)
          .at[:, :H2].set(p["bc1"])
          .at[:, H2:H].set(p["bp1"]))                                 # (1, HP)

    w2 = (jnp.zeros((HP, OUT_PAD), jnp.float32)
          .at[:H, 0:1].set(p["wc2"])
          .at[H2:H, 1:1 + N_P2].set(p["wp2"])
          .astype(matmul_dtype))                                      # (HP, 128)
    b2 = (jnp.zeros((1, OUT_PAD), jnp.float32)
          .at[:, 0:1].set(p["bc2"])
          .at[:, 1:1 + N_P2].set(p["bp2"]))                           # (1, 128)

    return {"w1": w1, "b1": b1, "w2": w2, "b2": b2}


def _vmem_capacity_bytes():
    """Physical per-TensorCore VMEM; conservative (v7x) fallback off-TPU."""
    try:
        return int(pltpu.get_tpu_info().vmem_capacity_bytes)
    except Exception:
        return 64 * 1024 * 1024


def _select_tb(B, phys_vmem):
    """Batch-tile selection. v7x-class parts (64 MiB VMEM, 2 TCs): make sure the
    'parallel' batch grid has >= 2 steps for mid-size batches. v5e/v6e
    (128 MiB, 1 TC): bigger tiles to amortize per-step overhead."""
    two_core_class = phys_vmem <= 64 * 1024 * 1024
    if two_core_class:
        if 16 <= B <= 512:
            return min(B, _round_up(pl.cdiv(B, 2), 8))
        return min(B, 256)
    return min(B, 512)


def _call_kernel(x, packed, TB, vmem_limit, flops, bytes_accessed,
                 single_buffer_weights):
    B, H = x.shape
    HP = packed["w1"].shape[1]
    grid = (pl.cdiv(B, TB),)
    const = lambda i: (0, 0)
    # Resident (constant-index) blocks don't need the default double buffer.
    wkw = {"pipeline_mode": pl.Buffered(1)} if single_buffer_weights else {}

    return pl.pallas_call(
        _critic_kernel,
        out_shape=jax.ShapeDtypeStruct((B, OUT_PAD), jnp.float32),
        grid=grid,
        in_specs=[
            pl.BlockSpec((TB, H), lambda i: (i, 0)),            # x: tiled on batch
            pl.BlockSpec((H, HP), const, **wkw),                # W1: resident
            pl.BlockSpec((1, HP), const, **wkw),                # b1: resident
            pl.BlockSpec((HP, OUT_PAD), const, **wkw),          # W2: resident
            pl.BlockSpec((1, OUT_PAD), const, **wkw),           # b2: resident
        ],
        out_specs=pl.BlockSpec((TB, OUT_PAD), lambda i: (i, 0)),
        compiler_params=pltpu.CompilerParams(
            dimension_semantics=("parallel",),
            vmem_limit_bytes=vmem_limit),
        cost_estimate=pl.CostEstimate(flops=flops, transcendentals=0,
                                      bytes_accessed=bytes_accessed),
    )(x, packed["w1"], packed["b1"], packed["w2"], packed["b2"])


def critic_forward(x, packed):
    """x: (B, H). packed: output of pack_params(). Returns (c2, p2)."""
    B, H = x.shape
    w1, b1, w2, b2 = packed["w1"], packed["b1"], packed["w2"], packed["b2"]
    HP = w1.shape[1]

    phys_vmem = _vmem_capacity_bytes()
    TB = _select_tb(B, phys_vmem)

    # Advisory cost estimate for the XLA scheduler.
    flops = 2 * B * H * HP + 2 * B * HP * OUT_PAD
    weight_bytes = (w1.size * w1.dtype.itemsize + w2.size * w2.dtype.itemsize
                    + (b1.size + b2.size) * 4)
    bytes_accessed = int(x.size * x.dtype.itemsize + weight_bytes
                         + B * OUT_PAD * 4)

    # VMEM budget: double-buffered x/out tiles + f32 h temporary + weights
    # (counted twice, conservatively covering the no-Buffered fallback), then
    # clamped to ~80% of physical VMEM so compiler scratch has headroom.
    est_vmem = int(2 * TB * H * x.dtype.itemsize
                   + 2 * TB * OUT_PAD * 4
                   + TB * HP * 4
                   + 2 * weight_bytes)
    vmem_limit = int(min(max(32 * 1024 * 1024, int(1.5 * est_vmem)),
                         int(0.8 * phys_vmem)))

    try:
        out = _call_kernel(x, packed, TB, vmem_limit, flops, bytes_accessed,
                           single_buffer_weights=True)
    except Exception:
        # Older Pallas versions may reject pl.Buffered(1) on an input
        # BlockSpec; fall back to default double-buffering (same numerics).
        out = _call_kernel(x, packed, TB, vmem_limit, flops, bytes_accessed,
                           single_buffer_weights=False)

    c2 = out[:, 0:1]           # (B, 1)
    p2 = out[:, 1:1 + N_P2]    # (B, 56)
    return c2, p2


def init_params(key, hidden_size):
    """Deterministic synthetic init (xavier-ish normal); (in, out) weight layout."""
    h2 = hidden_size // 2
    ks = jax.random.split(key, 4)

    def xavier(k, fan_in, fan_out):
        std = (2.0 / (fan_in + fan_out)) ** 0.5
        return std * jax.random.normal(k, (fan_in, fan_out), dtype=jnp.float32)

    return {
        "wc1": xavier(ks[0], hidden_size, h2),
        "bc1": jnp.zeros((1, h2), jnp.float32),
        "wp1": xavier(ks[1], hidden_size, h2),
        "bp1": jnp.zeros((1, h2), jnp.float32),
        "wc2": xavier(ks[2], hidden_size, 1),
        "bc2": jnp.zeros((1, 1), jnp.float32),
        "wp2": xavier(ks[3], h2, N_P2),
        "bp2": jnp.zeros((1, N_P2), jnp.float32),
    }


def critic_forward_ref(x, p):
    """Plain-JAX reference mirroring the PyTorch forward."""
    c1 = jax.nn.relu(x @ p["wc1"] + p["bc1"])
    p1 = jax.nn.relu(x @ p["wp1"] + p["bp1"])
    c2 = jnp.concatenate([c1, p1], axis=-1) @ p["wc2"] + p["bc2"]
    p2 = p1 @ p["wp2"] + p["bp2"]
    return c2, p2


if __name__ == "__main__":
    B, H = 8, 32
    key = jax.random.PRNGKey(0)
    kx, kp = jax.random.split(key)
    x = jax.random.normal(kx, (B, H), dtype=jnp.float32)
    params = init_params(kp, H)
    packed = pack_params(params)   # auto f32 here (H=32); bf16 kicks in for H >= 1024

    c2, p2 = critic_forward(x, packed)
    jax.block_until_ready((c2, p2))

    c2_ref, p2_ref = critic_forward_ref(x, params)
    assert c2.shape == (B, 1) and p2.shape == (B, N_P2)
    assert jnp.allclose(c2, c2_ref, atol=1e-5, rtol=1e-5)
    assert jnp.allclose(p2, p2_ref, atol=1e-5, rtol=1e-5)

    print("KERNEL_OK")
</pallas_src>

<mosaic_0001>
module attributes {stable_mosaic.version = 11 : i64} {
  func.func @_critic_kernel(%arg0: i32, %arg1: memref<8x32xf32, #tpu.memory_space<vmem>>, %arg2: memref<32x256xf32, #tpu.memory_space<vmem>>, %arg3: memref<1x256xf32, #tpu.memory_space<vmem>>, %arg4: memref<256x128xf32, #tpu.memory_space<vmem>>, %arg5: memref<1x128xf32, #tpu.memory_space<vmem>>, %arg6: memref<8x128xf32, #tpu.memory_space<vmem>>) attributes {dimension_semantics = [#tpu.dimension_semantics<parallel>], iteration_bounds = array<i64: 1>, scalar_prefetch = 0 : i64, scratch_operands = 0 : i64, tpu.core_type = #tpu.core_type<tc>, window_params = [{transform_indices = @transform_0, window_bounds = array<i64: 8, 32>}, {pipeline_mode = #tpu.pipeline_mode<synchronous>, transform_indices = @transform_1, window_bounds = array<i64: 32, 256>}, {pipeline_mode = #tpu.pipeline_mode<synchronous>, transform_indices = @transform_2, window_bounds = array<i64: 1, 256>}, {pipeline_mode = #tpu.pipeline_mode<synchronous>, transform_indices = @transform_3, window_bounds = array<i64: 256, 128>}, {pipeline_mode = #tpu.pipeline_mode<synchronous>, transform_indices = @transform_4, window_bounds = array<i64: 1, 128>}, {transform_indices = @transform_5, window_bounds = array<i64: 8, 128>}]} {
    %c0 = arith.constant 0 : index
    %c0_0 = arith.constant 0 : index
    %0 = vector.load %arg1[%c0, %c0_0] : memref<8x32xf32, #tpu.memory_space<vmem>>, vector<8x32xf32>
    %c0_1 = arith.constant 0 : index
    %c0_2 = arith.constant 0 : index
    %1 = vector.load %arg2[%c0_1, %c0_2] : memref<32x256xf32, #tpu.memory_space<vmem>>, vector<32x256xf32>
    %cst = arith.constant dense<0.000000e+00> : vector<8x256xf32>
    %2 = tpu.matmul %0, %1, %cst {dimension_numbers = #tpu.dot_dimension_numbers<[1], [0], [0], [1], [0, 0, 1, 1], [], []>} : vector<8x32xf32>, vector<32x256xf32>, vector<8x256xf32> -> vector<8x256xf32>
    %c0_3 = arith.constant 0 : index
    %c0_4 = arith.constant 0 : index
    %3 = vector.load %arg3[%c0_3, %c0_4] : memref<1x256xf32, #tpu.memory_space<vmem>>, vector<1x256xf32>
    %4 = vector.broadcast %3 : vector<1x256xf32> to vector<8x256xf32>
    %5 = arith.addf %2, %4 : vector<8x256xf32>
    %cst_5 = arith.constant 0.000000e+00 : f32
    %6 = vector.broadcast %cst_5 : f32 to vector<8x256xf32>
    %7 = arith.maximumf %5, %6 : vector<8x256xf32>
    %c0_6 = arith.constant 0 : index
    %c0_7 = arith.constant 0 : index
    %8 = vector.load %arg4[%c0_6, %c0_7] : memref<256x128xf32, #tpu.memory_space<vmem>>, vector<256x128xf32>
    %cst_8 = arith.constant dense<0.000000e+00> : vector<8x128xf32>
    %9 = tpu.matmul %7, %8, %cst_8 {dimension_numbers = #tpu.dot_dimension_numbers<[1], [0], [0], [1], [0, 0, 1, 1], [], []>} : vector<8x256xf32>, vector<256x128xf32>, vector<8x128xf32> -> vector<8x128xf32>
    %c0_9 = arith.constant 0 : index
    %c0_10 = arith.constant 0 : index
    %10 = vector.load %arg5[%c0_9, %c0_10] : memref<1x128xf32, #tpu.memory_space<vmem>>, vector<1x128xf32>
    %11 = vector.broadcast %10 : vector<1x128xf32> to vector<8x128xf32>
    %12 = arith.addf %9, %11 : vector<8x128xf32>
    %c0_11 = arith.constant 0 : index
    %c0_12 = arith.constant 0 : index
    %13 = vector.load %arg6[%c0_11, %c0_12] : memref<8x128xf32, #tpu.memory_space<vmem>>, vector<8x128xf32>
    tpu.vector_store %arg6[%c0_11, %c0_12], %12 {strides = array<i32>} : memref<8x128xf32, #tpu.memory_space<vmem>>, vector<8x128xf32>,
    return
  }
  func.func @transform_0(%arg0: i32) -> (i32, i32) {
    %c0_i32 = arith.constant 0 : i32
    %c0_i32_0 = arith.constant 0 : i32
    return %arg0, %c0_i32 : i32, i32
  }
  func.func @transform_1(%arg0: i32) -> (i32, i32) {
    %c0_i32 = arith.constant 0 : i32
    %c0_i32_0 = arith.constant 0 : i32
    %c0_i32_1 = arith.constant 0 : i32
    return %c0_i32, %c0_i32_0 : i32, i32
  }
  func.func @transform_2(%arg0: i32) -> (i32, i32) {
    %c0_i32 = arith.constant 0 : i32
    %c0_i32_0 = arith.constant 0 : i32
    %c0_i32_1 = arith.constant 0 : i32
    return %c0_i32, %c0_i32_0 : i32, i32
  }
  func.func @transform_3(%arg0: i32) -> (i32, i32) {
    %c0_i32 = arith.constant 0 : i32
    %c0_i32_0 = arith.constant 0 : i32
    %c0_i32_1 = arith.constant 0 : i32
    return %c0_i32, %c0_i32_0 : i32, i32
  }
  func.func @transform_4(%arg0: i32) -> (i32, i32) {
    %c0_i32 = arith.constant 0 : i32
    %c0_i32_0 = arith.constant 0 : i32
    %c0_i32_1 = arith.constant 0 : i32
    return %c0_i32, %c0_i32_0 : i32, i32
  }
  func.func @transform_5(%arg0: i32) -> (i32, i32) {
    %c0_i32 = arith.constant 0 : i32
    %c0_i32_0 = arith.constant 0 : i32
    return %arg0, %c0_i32 : i32, i32
  }
}

module attributes {stable_mosaic.version = 11 : i64} {
  func.func @_critic_kernel(%arg0: i32, %arg1: memref<8x32xf32, #tpu.memory_space<vmem>>, %arg2: memref<32x256xf32, #tpu.memory_space<vmem>>, %arg3: memref<1x256xf32, #tpu.memory_space<vmem>>, %arg4: memref<256x128xf32, #tpu.memory_space<vmem>>, %arg5: memref<1x128xf32, #tpu.memory_space<vmem>>, %arg6: memref<8x128xf32, #tpu.memory_space<vmem>>) attributes {dimension_semantics = [#tpu.dimension_semantics<parallel>], iteration_bounds = array<i64: 1>, scalar_prefetch = 0 : i64, scratch_operands = 0 : i64, tpu.core_type = #tpu.core_type<tc>, window_params = [{transform_indices = @transform_0, window_bounds = array<i64: 8, 32>}, {pipeline_mode = #tpu.pipeline_mode<synchronous>, transform_indices = @transform_1, window_bounds = array<i64: 32, 256>}, {pipeline_mode = #tpu.pipeline_mode<synchronous>, transform_indices = @transform_2, window_bounds = array<i64: 1, 256>}, {pipeline_mode = #tpu.pipeline_mode<synchronous>, transform_indices = @transform_3, window_bounds = array<i64: 256, 128>}, {pipeline_mode = #tpu.pipeline_mode<synchronous>, transform_indices = @transform_4, window_bounds = array<i64: 1, 128>}, {transform_indices = @transform_5, window_bounds = array<i64: 8, 128>}]} {
    %c0 = arith.constant 0 : index
    %c0_0 = arith.constant 0 : index
    %0 = vector.load %arg1[%c0, %c0_0] : memref<8x32xf32, #tpu.memory_space<vmem>>, vector<8x32xf32>
    %c0_1 = arith.constant 0 : index
    %c0_2 = arith.constant 0 : index
    %1 = vector.load %arg2[%c0_1, %c0_2] : memref<32x256xf32, #tpu.memory_space<vmem>>, vector<32x256xf32>
    %cst = arith.constant dense<0.000000e+00> : vector<8x256xf32>
    %2 = tpu.matmul %0, %1, %cst {dimension_numbers = #tpu.dot_dimension_numbers<[1], [0], [0], [1], [0, 0, 1, 1], [], []>} : vector<8x32xf32>, vector<32x256xf32>, vector<8x256xf32> -> vector<8x256xf32>
    %c0_3 = arith.constant 0 : index
    %c0_4 = arith.constant 0 : index
    %3 = vector.load %arg3[%c0_3, %c0_4] : memref<1x256xf32, #tpu.memory_space<vmem>>, vector<1x256xf32>
    %4 = vector.broadcast %3 : vector<1x256xf32> to vector<8x256xf32>
    %5 = arith.addf %2, %4 : vector<8x256xf32>
    %cst_5 = arith.constant 0.000000e+00 : f32
    %6 = vector.broadcast %cst_5 : f32 to vector<8x256xf32>
    %7 = arith.maximumf %5, %6 : vector<8x256xf32>
    %c0_6 = arith.constant 0 : index
    %c0_7 = arith.constant 0 : index
    %8 = vector.load %arg4[%c0_6, %c0_7] : memref<256x128xf32, #tpu.memory_space<vmem>>, vector<256x128xf32>
    %cst_8 = arith.constant dense<0.000000e+00> : vector<8x128xf32>
    %9 = tpu.matmul %7, %8, %cst_8 {dimension_numbers = #tpu.dot_dimension_numbers<[1], [0], [0], [1], [0, 0, 1, 1], [], []>} : vector<8x256xf32>, vector<256x128xf32>, vector<8x128xf32> -> vector<8x128xf32>
    %c0_9 = arith.constant 0 : index
    %c0_10 = arith.constant 0 : index
    %10 = vector.load %arg5[%c0_9, %c0_10] : memref<1x128xf32, #tpu.memory_space<vmem>>, vector<1x128xf32>
    %11 = vector.broadcast %10 : vector<1x128xf32> to vector<8x128xf32>
    %12 = arith.addf %9, %11 : vector<8x128xf32>
    %c0_11 = arith.constant 0 : index
    %c0_12 = arith.constant 0 : index
    %13 = vector.load %arg6[%c0_11, %c0_12] : memref<8x128xf32, #tpu.memory_space<vmem>>, vector<8x128xf32>
    tpu.vector_store %arg6[%c0_11, %c0_12], %12 {strides = array<i32>} : memref<8x128xf32, #tpu.memory_space<vmem>>, vector<8x128xf32>,
    return
  }
  func.func @transform_0(%arg0: i32) -> (i32, i32) {
    %c0_i32 = arith.constant 0 : i32
    %c0_i32_0 = arith.constant 0 : i32
    return %arg0, %c0_i32 : i32, i32
  }
  func.func @transform_1(%arg0: i32) -> (i32, i32) {
    %c0_i32 = arith.constant 0 : i32
    %c0_i32_0 = arith.constant 0 : i32
    %c0_i32_1 = arith.constant 0 : i32
    return %c0_i32, %c0_i32_0 : i32, i32
  }
  func.func @transform_2(%arg0: i32) -> (i32, i32) {
    %c0_i32 = arith.constant 0 : i32
    %c0_i32_0 = arith.constant 0 : i32
    %c0_i32_1 = arith.constant 0 : i32
    return %c0_i32, %c0_i32_0 : i32, i32
  }
  func.func @transform_3(%arg0: i32) -> (i32, i32) {
    %c0_i32 = arith.constant 0 : i32
    %c0_i32_0 = arith.constant 0 : i32
    %c0_i32_1 = arith.constant 0 : i32
    return %c0_i32, %c0_i32_0 : i32, i32
  }
  func.func @transform_4(%arg0: i32) -> (i32, i32) {
    %c0_i32 = arith.constant 0 : i32
    %c0_i32_0 = arith.constant 0 : i32
    %c0_i32_1 = arith.constant 0 : i32
    return %c0_i32, %c0_i32_0 : i32, i32
  }
  func.func @transform_5(%arg0: i32) -> (i32, i32) {
    %c0_i32 = arith.constant 0 : i32
    %c0_i32_0 = arith.constant 0 : i32
    return %arg0, %c0_i32 : i32, i32
  }
}

</mosaic_0001>

<llo_original>
// kernel: tpu_custom_call.1
$region0: #{tpu_custom_call.1}
  #allocation0 [shape = 'u32[]', space=smem, size = 0x4, offset = 0x4, fixed_abs, tag = 'smem constant byte address 0x4 - core index']
  #allocation1 [shape = 'u32[72,128]{1,0:T(1,128)}', space=vmem, size = 0x9000, scoped, tag = 'internal scratch']
  %s0 = inlined_call_operand.hbm [shape: f32[8,32], index: 0, kind: input, shape index: {}]
  %s1 = inlined_call_operand.hbm [shape: f32[32,256], index: 1, kind: input, shape index: {}]
  %s2 = inlined_call_operand.hbm [shape: f32[1,256], index: 2, kind: input, shape index: {}]
  %s3 = inlined_call_operand.hbm [shape: f32[256,128], index: 3, kind: input, shape index: {}]
  %s4 = inlined_call_operand.vmem [shape: f32[1,128], index: 4, kind: input, shape index: {}]
  %s5 = inlined_call_operand.hbm [shape: f32[8,128], index: 5, kind: output, shape index: {}]
  %s6 = sld [smem:[#allocation0]]
  $region46: #{tpu_custom_call.1} parent=0
    _
  %s8 = ssub.s32 1, %s6
  %s9 = scalar_select 0, %s8, %s6
  $region1: #{tpu_custom_call.1} parent=0
    #allocation2 [shape = 'u8[4096]{0}', space=vmem, size = 0x1000, scoped, tag = 'input window, operand 0, single buffered']
    #allocation3 [shape = 's32[1]{0}', space=sflag, size = 0x4, scoped, tag = 'scoped memory for tpu_custom_call.1']
    #allocation4 [shape = 's32[1]{0}', space=sflag, size = 0x4, scoped, tag = 'scoped memory for tpu_custom_call.1']
    #allocation5 [shape = 'u8[32768]{0}', space=vmem, size = 0x8000, scoped, tag = 'input window, operand 1, single buffered']
    #allocation6 [shape = 's32[1]{0}', space=sflag, size = 0x4, scoped, tag = 'scoped memory for tpu_custom_call.1']
    #allocation7 [shape = 'u8[1024]{0}', space=vmem, size = 0x400, scoped, tag = 'input window, operand 2, single buffered']
    #allocation8 [shape = 'u8[131072]{0}', space=vmem, size = 0x20000, scoped, tag = 'input window, operand 3, single buffered']
    #allocation9 [shape = 's32[1]{0}', space=sflag, size = 0x4, scoped, tag = 'scoped memory for tpu_custom_call.1']
    #allocation10 [shape = 'u8[4096]{0}', space=vmem, size = 0x1000, scoped, tag = 'output window, operand 0, single buffered']
    %10 = vsyncpa [#allocation3], 0
    %11 = vsyncpa [#allocation6], 0
    %12 = vsyncpa [#allocation9], 0
    %13 = vsyncpa [#allocation4], 0
    // Predicated region
    $region2: #{tpu_custom_call.1} parent=1 // pred_check
      _
    $region3: #{tpu_custom_call.1} parent=1 // pred_check_branch
      %15 = sbr.rel (0) target = $region5
    $region4: #{tpu_custom_call.1} parent=1 // pred_region
      %17 = vsyncadd [#allocation3], 0
      %s19 = sshll.u32 %s0, 4
      %s20 = int_to_ptr.hbm [resolvable:$true] %s19
      %s21 = sshll.u32 [#allocation2], 4
      %s22 = int_to_ptr.vmem [resolvable:$true] %s21
      %24 = dma.hbm_to_vmem [thread:$0]  %s20, 128, %s22, [#allocation3]
    $region5: #{tpu_custom_call.1} parent=1 // pred_fallthru
      _
    // Predicated region
    $region6: #{tpu_custom_call.1} parent=1 // pred_check
      _
    $region7: #{tpu_custom_call.1} parent=1 // pred_check_branch
      %26 = sbr.rel (0) target = $region9
    $region8: #{tpu_custom_call.1} parent=1 // pred_region
      %28 = vsyncadd [#allocation6], 0
      %s29 = sshll.u32 %s1, 4
      %s30 = int_to_ptr.hbm [resolvable:$true] %s29
      %s31 = sshll.u32 [#allocation5], 4
      %s32 = int_to_ptr.vmem [resolvable:$true] %s31
      %37 = dma.hbm_to_vmem [thread:$0]  %s30, 1024, %s32, [#allocation6], 256, 256, 16
    $region9: #{tpu_custom_call.1} parent=1 // pred_fallthru
      _
    // Predicated region
    $region10: #{tpu_custom_call.1} parent=1 // pred_check
      _
    $region11: #{tpu_custom_call.1} parent=1 // pred_check_branch
      %39 = sbr.rel (0) target = $region13
    $region12: #{tpu_custom_call.1} parent=1 // pred_region
      %41 = vsyncadd [#allocation6], 0
      %s43 = sshll.u32 %s2, 4
      %s44 = int_to_ptr.hbm [resolvable:$true] %s43
      %s45 = sshll.u32 [#allocation7], 4
      %s46 = int_to_ptr.vmem [resolvable:$true] %s45
      %48 = dma.hbm_to_vmem [thread:$0]  %s44, 32, %s46, [#allocation6]
    $region13: #{tpu_custom_call.1} parent=1 // pred_fallthru
      _
    // Predicated region
    $region14: #{tpu_custom_call.1} parent=1 // pred_check
      _
    $region15: #{tpu_custom_call.1} parent=1 // pred_check_branch
      %50 = sbr.rel (0) target = $region17
    $region16: #{tpu_custom_call.1} parent=1 // pred_region
      %52 = vsyncadd [#allocation9], 0
      %s53 = sshll.u32 %s3, 4
      %s54 = int_to_ptr.hbm [resolvable:$true] %s53
      %s55 = sshll.u32 [#allocation8], 4
      %s56 = int_to_ptr.vmem [resolvable:$true] %s55
      %61 = dma.hbm_to_vmem [thread:$0]  %s54, 4096, %s56, [#allocation9], 128, 128, 8
    $region17: #{tpu_custom_call.1} parent=1 // pred_fallthru
      _
    // Predicated region
    $region18: #{tpu_custom_call.1} parent=1 // pred_check
      _
    $region19: #{tpu_custom_call.1} parent=1 // pred_check_branch
      %63 = sbr.rel (0) target = $region21
    $region20: #{tpu_custom_call.1} parent=1 // pred_region
      _
    $region21: #{tpu_custom_call.1} parent=1 // pred_fallthru
      _
    // Predicated region
    $region22: #{tpu_custom_call.1} parent=1 // pred_check
      _
    $region23: #{tpu_custom_call.1} parent=1 // pred_check_branch
      %65 = sbr.rel (0) target = $region25
    $region24: #{tpu_custom_call.1} parent=1 // pred_region
      %67 = dma.done [#allocation3], 128
    $region25: #{tpu_custom_call.1} parent=1 // pred_fallthru
      _
    // Predicated region
    $region26: #{tpu_custom_call.1} parent=1 // pred_check
      _
    $region27: #{tpu_custom_call.1} parent=1 // pred_check_branch
      %69 = sbr.rel (0) target = $region29
    $region28: #{tpu_custom_call.1} parent=1 // pred_region
      %71 = dma.done [#allocation6], 1024
    $region29: #{tpu_custom_call.1} parent=1 // pred_fallthru
      _
    // Predicated region
    $region30: #{tpu_custom_call.1} parent=1 // pred_check
      _
    $region31: #{tpu_custom_call.1} parent=1 // pred_check_branch
      %73 = sbr.rel (0) target = $region33
    $region32: #{tpu_custom_call.1} parent=1 // pred_region
      %75 = dma.done [#allocation6], 32
    $region33: #{tpu_custom_call.1} parent=1 // pred_fallthru
      _
    // Predicated region
    $region34: #{tpu_custom_call.1} parent=1 // pred_check
      _
    $region35: #{tpu_custom_call.1} parent=1 // pred_check_branch
      %77 = sbr.rel (0) target = $region37
    $region36: #{tpu_custom_call.1} parent=1 // pred_region
      %79 = dma.done [#allocation9], 4096
    $region37: #{tpu_custom_call.1} parent=1 // pred_fallthru
      _
    %v80 = vld [vmem:[#allocation2] sm:$0xff]
    %v81 = vld [vmem:[#allocation5] sm:$0xff]
    %v82 = vld [vmem:[#allocation5 + $0x8] sm:$0xff]
    %v83 = vld [vmem:[#allocation5 + $0x10] sm:$0xff]
    %v84 = vld [vmem:[#allocation5 + $0x18] sm:$0xff]
    %v85 = vld [vmem:[#allocation5 + $0x20] sm:$0xff]
    %v86 = vld [vmem:[#allocation5 + $0x28] sm:$0xff]
    %v87 = vld [vmem:[#allocation5 + $0x30] sm:$0xff]
    %v88 = vld [vmem:[#allocation5 + $0x38] sm:$0xff]
    %v89 = vld [vmem:[#allocation7] sm:$0x3]
    %v91 = vperm.slane %v89, 0
    %v92 = vperm.slane %v89, 1
    %vm95 = vcmask 261120
    %v97 = vsel %vm95, %v80, 0
    %99 = vmatpush.msra.mxu0 0.0
    %100 = vmatpush.msra.mxu0 0.0
    %101 = vmatpush.msra.mxu0 0.0
    %102 = vmatpush.msra.mxu0 0.0
    %103 = vmatpush.msra.mxu0 0.0
    %104 = vmatpush.msra.mxu0 0.0
    %105 = vmatpush.msra.mxu0 0.0
    %106 = vmatpush.msra.mxu0 0.0
    %107 = vmatpush.msra.mxu0 0.0
    %108 = vmatpush.msra.mxu0 0.0
    %109 = vmatpush.msra.mxu0 0.0
    %110 = vmatpush.msra.mxu0 0.0
    %111 = vmatpush.msra.mxu0 %v87
    %112 = vmatpush.msra.mxu0 %v85
    %113 = vmatpush.msra.mxu0 %v83
    %114 = vmatpush.msra.mxu0 %v81
    %115 = vmatmul.f32.gmra.mxu0 %v97
    %v116 = vpop.f32.mrf.mxu0
    %v117 = vadd.f32 %v91, %v116
    %118 = vdwg.mxu0
    %119 = vmatpush.msra.mxu0 0.0
    %120 = vmatpush.msra.mxu0 0.0
    %121 = vmatpush.msra.mxu0 0.0
    %122 = vmatpush.msra.mxu0 0.0
    %123 = vmatpush.msra.mxu0 0.0
    %124 = vmatpush.msra.mxu0 0.0
    %125 = vmatpush.msra.mxu0 0.0
    %126 = vmatpush.msra.mxu0 0.0
    %127 = vmatpush.msra.mxu0 0.0
    %128 = vmatpush.msra.mxu0 0.0
    %129 = vmatpush.msra.mxu0 0.0
    %130 = vmatpush.msra.mxu0 0.0
    %131 = vmatpush.msra.mxu0 %v88
    %132 = vmatpush.msra.mxu0 %v86
    %133 = vmatpush.msra.mxu0 %v84
    %134 = vmatpush.msra.mxu0 %v82
    %135 = vmatmul.f32.gmra.mxu0 %v97
    %v136 = vpop.f32.mrf.mxu0
    %v137 = vadd.f32 %v92, %v136
    %138 = vdwg.mxu0
    %v139 = vmax.f32 %v117, 0.0
    %v140 = vmax.f32 %v137, 0.0
    %v141 = vld [vmem:[#allocation8] sm:$0xff]
    %v142 = vld [vmem:[#allocation8 + $0x8] sm:$0xff]
    %v143 = vld [vmem:[#allocation8 + $0x10] sm:$0xff]
    %v144 = vld [vmem:[#allocation8 + $0x18] sm:$0xff]
    %v145 = vld [vmem:[#allocation8 + $0x20] sm:$0xff]
    %v146 = vld [vmem:[#allocation8 + $0x28] sm:$0xff]
    %v147 = vld [vmem:[#allocation8 + $0x30] sm:$0xff]
    %v148 = vld [vmem:[#allocation8 + $0x38] sm:$0xff]
    %v149 = vld [vmem:[#allocation8 + $0x40] sm:$0xff]
    %v150 = vld [vmem:[#allocation8 + $0x48] sm:$0xff]
    %v151 = vld [vmem:[#allocation8 + $0x50] sm:$0xff]
    %v152 = vld [vmem:[#allocation8 + $0x58] sm:$0xff]
    %v153 = vld [vmem:[#allocation8 + $0x60] sm:$0xff]
    %v154 = vld [vmem:[#allocation8 + $0x68] sm:$0xff]
    %v155 = vld [vmem:[#allocation8 + $0x70] sm:$0xff]
    %v156 = vld [vmem:[#allocation8 + $0x78] sm:$0xff]
    %v157 = vld [vmem:[#allocation8 + $0x80] sm:$0xff]
    %v158 = vld [vmem:[#allocation8 + $0x88] sm:$0xff]
    %v159 = vld [vmem:[#allocation8 + $0x90] sm:$0xff]
    %v160 = vld [vmem:[#allocation8 + $0x98] sm:$0xff]
    %v161 = vld [vmem:[#allocation8 + $0xa0] sm:$0xff]
    %v162 = vld [vmem:[#allocation8 + $0xa8] sm:$0xff]
    %v163 = vld [vmem:[#allocation8 + $0xb0] sm:$0xff]
    %v164 = vld [vmem:[#allocation8 + $0xb8] sm:$0xff]
    %v165 = vld [vmem:[#allocation8 + $0xc0] sm:$0xff]
    %v166 = vld [vmem:[#allocation8 + $0xc8] sm:$0xff]
    %v167 = vld [vmem:[#allocation8 + $0xd0] sm:$0xff]
    %v168 = vld [vmem:[#allocation8 + $0xd8] sm:$0xff]
    %v169 = vld [vmem:[#allocation8 + $0xe0] sm:$0xff]
    %v170 = vld [vmem:[#allocation8 + $0xe8] sm:$0xff]
    %v171 = vld [vmem:[#allocation8 + $0xf0] sm:$0xff]
    %v172 = vld [vmem:[#allocation8 + $0xf8] sm:$0xff]
    %v173 = vld [vmem:[%s4] sm:$0x1]
    %v175 = vperm.slane %v173, 0
    %177 = vmatpush.msra.mxu0 %v156
    %178 = vmatpush.msra.mxu0 %v155
    %179 = vmatpush.msra.mxu0 %v154
    %180 = vmatpush.msra.mxu0 %v153
    %181 = vmatpush.msra.mxu0 %v152
    %182 = vmatpush.msra.mxu0 %v151
    %183 = vmatpush.msra.mxu0 %v150
    %184 = vmatpush.msra.mxu0 %v149
    %185 = vmatpush.msra.mxu0 %v148
    %186 = vmatpush.msra.mxu0 %v147
    %187 = vmatpush.msra.mxu0 %v146
    %188 = vmatpush.msra.mxu0 %v145
    %189 = vmatpush.msra.mxu0 %v144
    %190 = vmatpush.msra.mxu0 %v143
    %191 = vmatpush.msra.mxu0 %v142
    %192 = vmatpush.msra.mxu0 %v141
    %193 = vmatmul.f32.gmra.mxu0 %v139
    %v194 = vpop.f32.mrf.mxu0
    %v195 = vadd.f32 %v175, %v194
    %196 = vdwg.mxu0
    %197 = vmatpush.msra.mxu0 %v172
    %198 = vmatpush.msra.mxu0 %v171
    %199 = vmatpush.msra.mxu0 %v170
    %200 = vmatpush.msra.mxu0 %v169
    %201 = vmatpush.msra.mxu0 %v168
    %202 = vmatpush.msra.mxu0 %v167
    %203 = vmatpush.msra.mxu0 %v166
    %204 = vmatpush.msra.mxu0 %v165
    %205 = vmatpush.msra.mxu0 %v164
    %206 = vmatpush.msra.mxu0 %v163
    %207 = vmatpush.msra.mxu0 %v162
    %208 = vmatpush.msra.mxu0 %v161
    %209 = vmatpush.msra.mxu0 %v160
    %210 = vmatpush.msra.mxu0 %v159
    %211 = vmatpush.msra.mxu0 %v158
    %212 = vmatpush.msra.mxu0 %v157
    %213 = vmatmul.f32.gmra.mxu0 %v140
    %v214 = vpop.f32.mrf.mxu0
    %v215 = vadd.f32 %v195, %v214
    %216 = vdwg.mxu0
    %217 = vst [vmem:[#allocation10] sm:$0xff] %v215
    // Predicated region
    $region38: #{tpu_custom_call.1} parent=1 // pred_check
      _
    $region39: #{tpu_custom_call.1} parent=1 // pred_check_branch
      %219 = sbr.rel (0) target = $region41
    $region40: #{tpu_custom_call.1} parent=1 // pred_region
      %221 = vsyncadd [#allocation4], 0
      %s223 = sshll.u32 [#allocation10], 4
      %s224 = int_to_ptr.vmem [resolvable:$true] %s223
      %s225 = sshll.u32 %s5, 4
      %s226 = int_to_ptr.hbm [resolvable:$true] %s225
      %228 = dma.vmem_to_hbm [thread:$0]  %s224, 128, %s226, [#allocation4]
    $region41: #{tpu_custom_call.1} parent=1 // pred_fallthru
      _
    // Predicated region
    $region42: #{tpu_custom_call.1} parent=1 // pred_check
      _
    $region43: #{tpu_custom_call.1} parent=1 // pred_check_branch
      %230 = sbr.rel (0) target = $region45
    $region44: #{tpu_custom_call.1} parent=1 // pred_region
      %232 = dma.done [#allocation4], 128
    $region45: #{tpu_custom_call.1} parent=1 // pred_fallthru
      _
    %233 = vsyncpa [#allocation3], 1
    %234 = vsyncpa [#allocation6], 1
    %235 = vsyncpa [#allocation9], 1
    %236 = vsyncpa [#allocation4], 1

// kernel: tpu_custom_call.1
$region0: #{tpu_custom_call.1}
  #allocation0 [shape = 'u32[]', space=smem, size = 0x4, offset = 0x4, fixed_abs, tag = 'smem constant byte address 0x4 - core index']
  #allocation1 [shape = 'u32[72,128]{1,0:T(1,128)}', space=vmem, size = 0x9000, scoped, tag = 'internal scratch']
  %s0 = inlined_call_operand.hbm [shape: f32[8,32], index: 0, kind: input, shape index: {}]
  %s1 = inlined_call_operand.hbm [shape: f32[32,256], index: 1, kind: input, shape index: {}]
  %s2 = inlined_call_operand.hbm [shape: f32[1,256], index: 2, kind: input, shape index: {}]
  %s3 = inlined_call_operand.hbm [shape: f32[256,128], index: 3, kind: input, shape index: {}]
  %s4 = inlined_call_operand.vmem [shape: f32[1,128], index: 4, kind: input, shape index: {}]
  %s5 = inlined_call_operand.hbm [shape: f32[8,128], index: 5, kind: output, shape index: {}]
  %s6 = sld [smem:[#allocation0]]
  $region46: #{tpu_custom_call.1} parent=0
    _
  %s8 = ssub.s32 1, %s6
  %s9 = scalar_select 0, %s8, %s6
  $region1: #{tpu_custom_call.1} parent=0
    #allocation2 [shape = 'u8[4096]{0}', space=vmem, size = 0x1000, scoped, tag = 'input window, operand 0, single buffered']
    #allocation3 [shape = 's32[1]{0}', space=sflag, size = 0x4, scoped, tag = 'scoped memory for tpu_custom_call.1']
    #allocation4 [shape = 's32[1]{0}', space=sflag, size = 0x4, scoped, tag = 'scoped memory for tpu_custom_call.1']
    #allocation5 [shape = 'u8[32768]{0}', space=vmem, size = 0x8000, scoped, tag = 'input window, operand 1, single buffered']
    #allocation6 [shape = 's32[1]{0}', space=sflag, size = 0x4, scoped, tag = 'scoped memory for tpu_custom_call.1']
    #allocation7 [shape = 'u8[1024]{0}', space=vmem, size = 0x400, scoped, tag = 'input window, operand 2, single buffered']
    #allocation8 [shape = 'u8[131072]{0}', space=vmem, size = 0x20000, scoped, tag = 'input window, operand 3, single buffered']
    #allocation9 [shape = 's32[1]{0}', space=sflag, size = 0x4, scoped, tag = 'scoped memory for tpu_custom_call.1']
    #allocation10 [shape = 'u8[4096]{0}', space=vmem, size = 0x1000, scoped, tag = 'output window, operand 0, single buffered']
    %10 = vsyncpa [#allocation3], 0
    %11 = vsyncpa [#allocation6], 0
    %12 = vsyncpa [#allocation9], 0
    %13 = vsyncpa [#allocation4], 0
    // Predicated region
    $region2: #{tpu_custom_call.1} parent=1 // pred_check
      _
    $region3: #{tpu_custom_call.1} parent=1 // pred_check_branch
      %15 = sbr.rel (0) target = $region5
    $region4: #{tpu_custom_call.1} parent=1 // pred_region
      %17 = vsyncadd [#allocation3], 0
      %s19 = sshll.u32 %s0, 4
      %s20 = int_to_ptr.hbm [resolvable:$true] %s19
      %s21 = sshll.u32 [#allocation2], 4
      %s22 = int_to_ptr.vmem [resolvable:$true] %s21
      %24 = dma.hbm_to_vmem [thread:$0]  %s20, 128, %s22, [#allocation3]
    $region5: #{tpu_custom_call.1} parent=1 // pred_fallthru
      _
    // Predicated region
    $region6: #{tpu_custom_call.1} parent=1 // pred_check
      _
    $region7: #{tpu_custom_call.1} parent=1 // pred_check_branch
      %26 = sbr.rel (0) target = $region9
    $region8: #{tpu_custom_call.1} parent=1 // pred_region
      %28 = vsyncadd [#allocation6], 0
      %s29 = sshll.u32 %s1, 4
      %s30 = int_to_ptr.hbm [resolvable:$true] %s29
      %s31 = sshll.u32 [#allocation5], 4
      %s32 = int_to_ptr.vmem [resolvable:$true] %s31
      %37 = dma.hbm_to_vmem [thread:$0]  %s30, 1024, %s32, [#allocation6], 256, 256, 16
    $region9: #{tpu_custom_call.1} parent=1 // pred_fallthru
      _
    // Predicated region
    $region10: #{tpu_custom_call.1} parent=1 // pred_check
      _
    $region11: #{tpu_custom_call.1} parent=1 // pred_check_branch
      %39 = sbr.rel (0) target = $region13
    $region12: #{tpu_custom_call.1} parent=1 // pred_region
      %41 = vsyncadd [#allocation6], 0
      %s43 = sshll.u32 %s2, 4
      %s44 = int_to_ptr.hbm [resolvable:$true] %s43
      %s45 = sshll.u32 [#allocation7], 4
      %s46 = int_to_ptr.vmem [resolvable:$true] %s45
      %48 = dma.hbm_to_vmem [thread:$0]  %s44, 32, %s46, [#allocation6]
    $region13: #{tpu_custom_call.1} parent=1 // pred_fallthru
      _
    // Predicated region
    $region14: #{tpu_custom_call.1} parent=1 // pred_check
      _
    $region15: #{tpu_custom_call.1} parent=1 // pred_check_branch
      %50 = sbr.rel (0) target = $region17
    $region16: #{tpu_custom_call.1} parent=1 // pred_region
      %52 = vsyncadd [#allocation9], 0
      %s53 = sshll.u32 %s3, 4
      %s54 = int_to_ptr.hbm [resolvable:$true] %s53
      %s55 = sshll.u32 [#allocation8], 4
      %s56 = int_to_ptr.vmem [resolvable:$true] %s55
      %61 = dma.hbm_to_vmem [thread:$0]  %s54, 4096, %s56, [#allocation9], 128, 128, 8
    $region17: #{tpu_custom_call.1} parent=1 // pred_fallthru
      _
    // Predicated region
    $region18: #{tpu_custom_call.1} parent=1 // pred_check
      _
    $region19: #{tpu_custom_call.1} parent=1 // pred_check_branch
      %63 = sbr.rel (0) target = $region21
    $region20: #{tpu_custom_call.1} parent=1 // pred_region
      _
    $region21: #{tpu_custom_call.1} parent=1 // pred_fallthru
      _
    // Predicated region
    $region22: #{tpu_custom_call.1} parent=1 // pred_check
      _
    $region23: #{tpu_custom_call.1} parent=1 // pred_check_branch
      %65 = sbr.rel (0) target = $region25
    $region24: #{tpu_custom_call.1} parent=1 // pred_region
      %67 = dma.done [#allocation3], 128
    $region25: #{tpu_custom_call.1} parent=1 // pred_fallthru
      _
    // Predicated region
    $region26: #{tpu_custom_call.1} parent=1 // pred_check
      _
    $region27: #{tpu_custom_call.1} parent=1 // pred_check_branch
      %69 = sbr.rel (0) target = $region29
    $region28: #{tpu_custom_call.1} parent=1 // pred_region
      %71 = dma.done [#allocation6], 1024
    $region29: #{tpu_custom_call.1} parent=1 // pred_fallthru
      _
    // Predicated region
    $region30: #{tpu_custom_call.1} parent=1 // pred_check
      _
    $region31: #{tpu_custom_call.1} parent=1 // pred_check_branch
      %73 = sbr.rel (0) target = $region33
    $region32: #{tpu_custom_call.1} parent=1 // pred_region
      %75 = dma.done [#allocation6], 32
    $region33: #{tpu_custom_call.1} parent=1 // pred_fallthru
      _
    // Predicated region
    $region34: #{tpu_custom_call.1} parent=1 // pred_check
      _
    $region35: #{tpu_custom_call.1} parent=1 // pred_check_branch
      %77 = sbr.rel (0) target = $region37
    $region36: #{tpu_custom_call.1} parent=1 // pred_region
      %79 = dma.done [#allocation9], 4096
    $region37: #{tpu_custom_call.1} parent=1 // pred_fallthru
      _
    %v80 = vld [vmem:[#allocation2] sm:$0xff]
    %v81 = vld [vmem:[#allocation5] sm:$0xff]
    %v82 = vld [vmem:[#allocation5 + $0x8] sm:$0xff]
    %v83 = vld [vmem:[#allocation5 + $0x10] sm:$0xff]
    %v84 = vld [vmem:[#allocation5 + $0x18] sm:$0xff]
    %v85 = vld [vmem:[#allocation5 + $0x20] sm:$0xff]
    %v86 = vld [vmem:[#allocation5 + $0x28] sm:$0xff]
    %v87 = vld [vmem:[#allocation5 + $0x30] sm:$0xff]
    %v88 = vld [vmem:[#allocation5 + $0x38] sm:$0xff]
    %v89 = vld [vmem:[#allocation7] sm:$0x3]
    %v91 = vperm.slane %v89, 0
    %v92 = vperm.slane %v89, 1
    %vm95 = vcmask 261120
    %v97 = vsel %vm95, %v80, 0
    %99 = vmatpush.msra.mxu0 0.0
    %100 = vmatpush.msra.mxu0 0.0
    %101 = vmatpush.msra.mxu0 0.0
    %102 = vmatpush.msra.mxu0 0.0
    %103 = vmatpush.msra.mxu0 0.0
    %104 = vmatpush.msra.mxu0 0.0
    %105 = vmatpush.msra.mxu0 0.0
    %106 = vmatpush.msra.mxu0 0.0
    %107 = vmatpush.msra.mxu0 0.0
    %108 = vmatpush.msra.mxu0 0.0
    %109 = vmatpush.msra.mxu0 0.0
    %110 = vmatpush.msra.mxu0 0.0
    %111 = vmatpush.msra.mxu0 %v87
    %112 = vmatpush.msra.mxu0 %v85
    %113 = vmatpush.msra.mxu0 %v83
    %114 = vmatpush.msra.mxu0 %v81
    %115 = vmatmul.f32.gmra.mxu0 %v97
    %v116 = vpop.f32.mrf.mxu0
    %v117 = vadd.f32 %v91, %v116
    %118 = vdwg.mxu0
    %119 = vmatpush.msra.mxu0 0.0
    %120 = vmatpush.msra.mxu0 0.0
    %121 = vmatpush.msra.mxu0 0.0
    %122 = vmatpush.msra.mxu0 0.0
    %123 = vmatpush.msra.mxu0 0.0
    %124 = vmatpush.msra.mxu0 0.0
    %125 = vmatpush.msra.mxu0 0.0
    %126 = vmatpush.msra.mxu0 0.0
    %127 = vmatpush.msra.mxu0 0.0
    %128 = vmatpush.msra.mxu0 0.0
    %129 = vmatpush.msra.mxu0 0.0
    %130 = vmatpush.msra.mxu0 0.0
    %131 = vmatpush.msra.mxu0 %v88
    %132 = vmatpush.msra.mxu0 %v86
    %133 = vmatpush.msra.mxu0 %v84
    %134 = vmatpush.msra.mxu0 %v82
    %135 = vmatmul.f32.gmra.mxu0 %v97
    %v136 = vpop.f32.mrf.mxu0
    %v137 = vadd.f32 %v92, %v136
    %138 = vdwg.mxu0
    %v139 = vmax.f32 %v117, 0.0
    %v140 = vmax.f32 %v137, 0.0
    %v141 = vld [vmem:[#allocation8] sm:$0xff]
    %v142 = vld [vmem:[#allocation8 + $0x8] sm:$0xff]
    %v143 = vld [vmem:[#allocation8 + $0x10] sm:$0xff]
    %v144 = vld [vmem:[#allocation8 + $0x18] sm:$0xff]
    %v145 = vld [vmem:[#allocation8 + $0x20] sm:$0xff]
    %v146 = vld [vmem:[#allocation8 + $0x28] sm:$0xff]
    %v147 = vld [vmem:[#allocation8 + $0x30] sm:$0xff]
    %v148 = vld [vmem:[#allocation8 + $0x38] sm:$0xff]
    %v149 = vld [vmem:[#allocation8 + $0x40] sm:$0xff]
    %v150 = vld [vmem:[#allocation8 + $0x48] sm:$0xff]
    %v151 = vld [vmem:[#allocation8 + $0x50] sm:$0xff]
    %v152 = vld [vmem:[#allocation8 + $0x58] sm:$0xff]
    %v153 = vld [vmem:[#allocation8 + $0x60] sm:$0xff]
    %v154 = vld [vmem:[#allocation8 + $0x68] sm:$0xff]
    %v155 = vld [vmem:[#allocation8 + $0x70] sm:$0xff]
    %v156 = vld [vmem:[#allocation8 + $0x78] sm:$0xff]
    %v157 = vld [vmem:[#allocation8 + $0x80] sm:$0xff]
    %v158 = vld [vmem:[#allocation8 + $0x88] sm:$0xff]
    %v159 = vld [vmem:[#allocation8 + $0x90] sm:$0xff]
    %v160 = vld [vmem:[#allocation8 + $0x98] sm:$0xff]
    %v161 = vld [vmem:[#allocation8 + $0xa0] sm:$0xff]
    %v162 = vld [vmem:[#allocation8 + $0xa8] sm:$0xff]
    %v163 = vld [vmem:[#allocation8 + $0xb0] sm:$0xff]
    %v164 = vld [vmem:[#allocation8 + $0xb8] sm:$0xff]
    %v165 = vld [vmem:[#allocation8 + $0xc0] sm:$0xff]
    %v166 = vld [vmem:[#allocation8 + $0xc8] sm:$0xff]
    %v167 = vld [vmem:[#allocation8 + $0xd0] sm:$0xff]
    %v168 = vld [vmem:[#allocation8 + $0xd8] sm:$0xff]
    %v169 = vld [vmem:[#allocation8 + $0xe0] sm:$0xff]
    %v170 = vld [vmem:[#allocation8 + $0xe8] sm:$0xff]
    %v171 = vld [vmem:[#allocation8 + $0xf0] sm:$0xff]
    %v172 = vld [vmem:[#allocation8 + $0xf8] sm:$0xff]
    %v173 = vld [vmem:[%s4] sm:$0x1]
    %v175 = vperm.slane %v173, 0
    %177 = vmatpush.msra.mxu0 %v156
    %178 = vmatpush.msra.mxu0 %v155
    %179 = vmatpush.msra.mxu0 %v154
    %180 = vmatpush.msra.mxu0 %v153
    %181 = vmatpush.msra.mxu0 %v152
    %182 = vmatpush.msra.mxu0 %v151
    %183 = vmatpush.msra.mxu0 %v150
    %184 = vmatpush.msra.mxu0 %v149
    %185 = vmatpush.msra.mxu0 %v148
    %186 = vmatpush.msra.mxu0 %v147
    %187 = vmatpush.msra.mxu0 %v146
    %188 = vmatpush.msra.mxu0 %v145
    %189 = vmatpush.msra.mxu0 %v144
    %190 = vmatpush.msra.mxu0 %v143
    %191 = vmatpush.msra.mxu0 %v142
    %192 = vmatpush.msra.mxu0 %v141
    %193 = vmatmul.f32.gmra.mxu0 %v139
    %v194 = vpop.f32.mrf.mxu0
    %v195 = vadd.f32 %v175, %v194
    %196 = vdwg.mxu0
    %197 = vmatpush.msra.mxu0 %v172
    %198 = vmatpush.msra.mxu0 %v171
    %199 = vmatpush.msra.mxu0 %v170
    %200 = vmatpush.msra.mxu0 %v169
    %201 = vmatpush.msra.mxu0 %v168
    %202 = vmatpush.msra.mxu0 %v167
    %203 = vmatpush.msra.mxu0 %v166
    %204 = vmatpush.msra.mxu0 %v165
    %205 = vmatpush.msra.mxu0 %v164
    %206 = vmatpush.msra.mxu0 %v163
    %207 = vmatpush.msra.mxu0 %v162
    %208 = vmatpush.msra.mxu0 %v161
    %209 = vmatpush.msra.mxu0 %v160
    %210 = vmatpush.msra.mxu0 %v159
    %211 = vmatpush.msra.mxu0 %v158
    %212 = vmatpush.msra.mxu0 %v157
    %213 = vmatmul.f32.gmra.mxu0 %v140
    %v214 = vpop.f32.mrf.mxu0
    %v215 = vadd.f32 %v195, %v214
    %216 = vdwg.mxu0
    %217 = vst [vmem:[#allocation10] sm:$0xff] %v215
    // Predicated region
    $region38: #{tpu_custom_call.1} parent=1 // pred_check
      _
    $region39: #{tpu_custom_call.1} parent=1 // pred_check_branch
      %219 = sbr.rel (0) target = $region41
    $region40: #{tpu_custom_call.1} parent=1 // pred_region
      %221 = vsyncadd [#allocation4], 0
      %s223 = sshll.u32 [#allocation10], 4
      %s224 = int_to_ptr.vmem [resolvable:$true] %s223
      %s225 = sshll.u32 %s5, 4
      %s226 = int_to_ptr.hbm [resolvable:$true] %s225
      %228 = dma.vmem_to_hbm [thread:$0]  %s224, 128, %s226, [#allocation4]
    $region41: #{tpu_custom_call.1} parent=1 // pred_fallthru
      _
    // Predicated region
    $region42: #{tpu_custom_call.1} parent=1 // pred_check
      _
    $region43: #{tpu_custom_call.1} parent=1 // pred_check_branch
      %230 = sbr.rel (0) target = $region45
    $region44: #{tpu_custom_call.1} parent=1 // pred_region
      %232 = dma.done [#allocation4], 128
    $region45: #{tpu_custom_call.1} parent=1 // pred_fallthru
      _
    %233 = vsyncpa [#allocation3], 1
    %234 = vsyncpa [#allocation6], 1
    %235 = vsyncpa [#allocation9], 1
    %236 = vsyncpa [#allocation4], 1

</llo_original>
